<compile_context>
chip_gen: v7x
topology: tpu7x:2x2x1
jax: 0.10.0
libtpu: 0.0.40
codegen_flags: <defaults>
</compile_context>

<pallas_src>
import functools

import jax
import jax.numpy as jnp
from jax.experimental import pallas as pl
from jax.experimental.pallas import tpu as pltpu


# ------------------------------ Pallas kernels ------------------------------ #
def _act_quant_fwd_kernel(x_ref, sz_ref, o_ref, *, maxq, strict):
    """forward(): scale * (clip(round(x/scale) + zero, 0, maxq) - zero).

    sz_ref holds per-token (row_tile, 2) columns [scale, zero]; they broadcast
    across the lane (hidden) axis.  Math in f32 vregs, cast once at the store.
    """
    x = x_ref[...].astype(jnp.float32)              # (rt, hidden)
    sz = sz_ref[...].astype(jnp.float32)            # (rt, 2)
    s = sz[:, 0:1]                                  # (rt, 1) per-token scale
    z = sz[:, 1:2]                                  # (rt, 1) per-token zero
    if strict:
        t = x / s                                   # bit-exact vs torch round(x/scale)
    else:
        t = x * (1.0 / s)                           # per-row exact reciprocal, hoisted
    q = jnp.clip(jnp.round(t) + z, 0.0, maxq)
    o_ref[...] = (s * (q - z)).astype(o_ref.dtype)


def _act_quant_fused_kernel(x_ref, o_ref, *, maxq):
    """find_params + forward fused: one read of x, one write of y."""
    x = x_ref[...].astype(jnp.float32)              # (rt, hidden)
    zero_col = jnp.zeros((x.shape[0], 1), jnp.float32)
    xmin = jnp.minimum(jnp.min(x, axis=-1, keepdims=True), zero_col)
    xmax = jnp.maximum(jnp.max(x, axis=-1, keepdims=True), zero_col)
    degenerate = (xmin == 0.0) & (xmax == 0.0)
    xmin = jnp.where(degenerate, -1.0, xmin)
    xmax = jnp.where(degenerate, 1.0, xmax)
    s = (xmax - xmin) / maxq                        # per-token scale, (rt, 1)
    z = jnp.round(-xmin / s)                        # per-token zero,  (rt, 1)
    inv_s = 1.0 / s                                 # per-row exact reciprocal
    q = jnp.clip(jnp.round(x * inv_s) + z, 0.0, maxq)
    o_ref[...] = (s * (q - z)).astype(o_ref.dtype)


# ------------------------- generation-aware tiling --------------------------- #
def _tpu_generation_info():
    """(target bytes/stream/step, physical VMEM bytes) for the local TPU."""
    kind = ""
    try:
        kind = jax.devices()[0].device_kind.lower()
    except Exception:
        pass
    phys_vmem = None
    try:
        phys_vmem = int(pltpu.get_tpu_info().vmem_capacity_bytes)
    except Exception:
        phys_vmem = None
    if "v7" in kind:
        target = 10 << 20
        phys_vmem = phys_vmem or (64 << 20)
    elif "v6" in kind:
        target = 8 << 20
        phys_vmem = phys_vmem or (128 << 20)
    elif "v5" in kind:
        target = 4 << 20
        phys_vmem = phys_vmem or (128 << 20)
    else:
        target = 6 << 20
        phys_vmem = phys_vmem or (64 << 20)         # conservative default
    return target, phys_vmem


def _sublane_multiple(itemsize):
    # packed sublane tiling: (8,128) f32, (16,128) bf16, (32,128) int8/fp8
    return max(8, 32 // max(1, int(itemsize)))


def _pick_row_tile(rows, hidden, in_itemsize, out_itemsize, *, has_sz):
    """Largest row tile that (a) moves ~target bytes per stream per step,
    (b) keeps the double-buffered VMEM footprint under ~48 MiB / 75% physical,
    (c) leaves the grid with >= 2 steps when the row count allows it."""
    target, phys_vmem = _tpu_generation_info()
    mult = _sublane_multiple(in_itemsize)
    budget = min(48 << 20, phys_vmem * 3 // 4)
    slack = 2 << 20
    # VMEM bytes per tile row: 2x-buffered x block + 2x-buffered out block
    # (+ lane-padded (rt,2)->(rt,128) f32 scale/zero block, also 2x-buffered).
    per_row = 2 * hidden * (in_itemsize + out_itemsize)
    if has_sz:
        per_row += 2 * 128 * 4
    rt_target = target // max(1, hidden * in_itemsize)
    rt_budget = max(mult, (budget - slack) // max(1, per_row))
    rt = int(min(rt_target, rt_budget))
    rt = max(mult, (rt // mult) * mult)
    # >= 2 grid steps when possible (pipelining + both TCs on v7x).
    if rows > mult:
        half = (((rows + 1) // 2) + mult - 1) // mult * mult
        rt = min(rt, max(mult, half))
    # Don't over-pad tiny inputs.
    rows_padded = -(-rows // mult) * mult
    rt = min(rt, max(mult, rows_padded))
    return max(mult, rt)


def _compiler_params(row_tile, hidden, in_itemsize, out_itemsize, *, has_sz):
    _, phys_vmem = _tpu_generation_info()
    vmem_needed = 2 * row_tile * hidden * (in_itemsize + out_itemsize)
    if has_sz:
        vmem_needed += 2 * row_tile * 128 * 4       # lane-padded (rt,2) block
    vmem_needed += 2 << 20                          # slack
    limit = max(int(vmem_needed), 32 << 20)
    limit = min(limit, int(phys_vmem))              # never exceed physical VMEM
    return pltpu.CompilerParams(
        dimension_semantics=("parallel",),
        vmem_limit_bytes=limit,
    )


def _cost_estimate(rows, hidden, in_itemsize, out_itemsize):
    return pl.CostEstimate(
        flops=10 * rows * hidden,
        transcendentals=0,
        bytes_accessed=rows * hidden * (in_itemsize + out_itemsize) + rows * 8,
    )


# --------------------------------- wrappers --------------------------------- #
def act_quantize_pallas(x, scale, zero, maxq, *, row_tile=None, strict=False):
    """ActQuantizer.forward.

    `scale` / `zero` may be per-token (shape [tokens] or [tokens, 1]), scalar,
    or the full-activation-shape buffers the torch module stores; only one
    value per token row is consumed (the repeat is a redundant broadcast).
    With strict=True the kernel keeps round(x / scale) bit-exact; the default
    fast path uses a hoisted per-row reciprocal (differences only at exact .5
    rounding ties, <= one quantization step).
    """
    orig_shape = x.shape
    hidden = orig_shape[-1]
    x2 = x.reshape(-1, hidden)
    rows = x2.shape[0]

    def per_token(p):
        p = jnp.asarray(p)
        if p.size == rows:
            return p.reshape(rows, 1)
        if p.size == 1:
            return jnp.broadcast_to(p.reshape(1, 1), (rows, 1))
        return p.reshape(rows, hidden)[:, :1]       # drop the repeated copies

    # Stack [scale, zero] into one (rows, 2) input: one DMA per step and half
    # the lane-padded VMEM footprint of two separate (rt,1) columns.
    sz = jnp.concatenate(
        [per_token(scale).astype(jnp.float32),
         per_token(zero).astype(jnp.float32)], axis=1)

    in_sz = x2.dtype.itemsize
    out_sz = x2.dtype.itemsize
    if row_tile is None:
        row_tile = _pick_row_tile(rows, hidden, in_sz, out_sz, has_sz=True)
    grid = (pl.cdiv(rows, row_tile),)                # partial tail block is masked

    kernel = functools.partial(_act_quant_fwd_kernel, maxq=float(maxq),
                               strict=bool(strict))
    out = pl.pallas_call(
        kernel,
        out_shape=jax.ShapeDtypeStruct((rows, hidden), x.dtype),
        grid=grid,
        in_specs=[
            pl.BlockSpec((row_tile, hidden), lambda i: (i, 0)),
            pl.BlockSpec((row_tile, 2), lambda i: (i, 0)),
        ],
        out_specs=pl.BlockSpec((row_tile, hidden), lambda i: (i, 0)),
        compiler_params=_compiler_params(row_tile, hidden, in_sz, out_sz,
                                         has_sz=True),
        cost_estimate=_cost_estimate(rows, hidden, in_sz, out_sz),
    )(x2, sz)
    return out.reshape(orig_shape)


def act_quant_fused_pallas(x, maxq, *, row_tile=None):
    """find_params(x) + forward(x) in a single pass over x."""
    orig_shape = x.shape
    if len(orig_shape) == 3:
        assert orig_shape[0] == 1, "Only batch size of 1 is supported!"
    hidden = orig_shape[-1]
    x2 = x.reshape(-1, hidden)
    rows = x2.shape[0]

    in_sz = x2.dtype.itemsize
    out_sz = x2.dtype.itemsize
    if row_tile is None:
        row_tile = _pick_row_tile(rows, hidden, in_sz, out_sz, has_sz=False)
    grid = (pl.cdiv(rows, row_tile),)

    kernel = functools.partial(_act_quant_fused_kernel, maxq=float(maxq))
    out = pl.pallas_call(
        kernel,
        out_shape=jax.ShapeDtypeStruct((rows, hidden), x.dtype),
        grid=grid,
        in_specs=[pl.BlockSpec((row_tile, hidden), lambda i: (i, 0))],
        out_specs=pl.BlockSpec((row_tile, hidden), lambda i: (i, 0)),
        compiler_params=_compiler_params(row_tile, hidden, in_sz, out_sz,
                                         has_sz=False),
        cost_estimate=_cost_estimate(rows, hidden, in_sz, out_sz),
    )(x2)
    return out.reshape(orig_shape)


# ---------------------- parameter setup (plain-JAX glue) -------------------- #
def find_params(x, maxq):
    """JAX port of ActQuantizer.find_params, returning PER-TOKEN [tokens, 1]
    scale / zero (the torch module repeats them to x.shape; that repeat is a
    pure broadcast and is done inside the kernel instead)."""
    init_shape = x.shape
    if len(init_shape) == 3:
        assert init_shape[0] == 1, "Only batch size of 1 is supported!"
    rx = x.reshape((-1, x.shape[-1])).astype(jnp.float32)
    zeros = jnp.zeros((rx.shape[0],), dtype=jnp.float32)
    xmin = jnp.minimum(rx.min(axis=1), zeros)
    xmax = jnp.maximum(rx.max(axis=1), zeros)
    degenerate = (xmin == 0.0) & (xmax == 0.0)
    xmin = jnp.where(degenerate, -1.0, xmin)
    xmax = jnp.where(degenerate, 1.0, xmax)
    scale = (xmax - xmin) / maxq
    zero = jnp.round(-xmin / scale)
    return scale[:, None], zero[:, None]


def reference_forward(x, scale, zero, maxq):
    """Plain-JAX transcription of asymmetric_quantize (the torch math)."""
    q = jnp.clip(jnp.round(x / scale) + zero, 0.0, float(maxq))
    return scale * (q - zero)


# ----------------------------------- main ----------------------------------- #
if __name__ == "__main__":
    key = jax.random.PRNGKey(0)
    k1, k2 = jax.random.split(key)

    bits = 8
    maxq = 2 ** bits - 1                             # configure(bits=8)

    # ---- Test 1: forward() with find_params-derived per-token params (f32) --
    x = jax.random.normal(k1, (1, 8, 128), dtype=jnp.float32) * 3.0
    scale_tok, zero_tok = find_params(x, maxq)       # [tokens, 1]
    y_ref = reference_forward(x.reshape(-1, 128), scale_tok, zero_tok,
                              maxq).reshape(x.shape)

    # Fast path (per-row reciprocal): exact .5 rounding ties may flip by at
    # most one quantization step.
    y = jax.block_until_ready(act_quantize_pallas(x, scale_tok, zero_tok, maxq))
    assert y.dtype == x.dtype
    d1 = jnp.abs(y - y_ref)
    assert float(jnp.max(d1)) <= float(jnp.max(scale_tok)) * 1.05 + 1e-5, \
        "forward (fast) error exceeds one quantization step"
    assert float(jnp.mean((d1 > 1e-4).astype(jnp.float32))) < 0.01, \
        "forward (fast): too many mismatches"

    # Strict path keeps round(x / scale) bit-exact with the reference.
    y_strict = jax.block_until_ready(
        act_quantize_pallas(x, scale_tok, zero_tok, maxq, strict=True))
    assert jnp.allclose(y_strict, y_ref, atol=1e-5, rtol=1e-5), \
        "forward (strict) mismatch"

    # 1b: full-shape (repeated) scale/zero buffers, as the torch module stores
    # them, must take the same path and give identical results.
    scale_full = jnp.broadcast_to(scale_tok, (8, 128)).reshape(1, 8, 128)
    zero_full = jnp.broadcast_to(zero_tok, (8, 128)).reshape(1, 8, 128)
    y_full = jax.block_until_ready(
        act_quantize_pallas(x, scale_full, zero_full, maxq))
    assert bool(jnp.array_equal(y, y_full)), "full-shape scale/zero path mismatch"

    # ---- Test 2: bf16 activations, odd token count (masked tail block) ------
    x_bf16 = (jax.random.normal(k2, (25, 256), dtype=jnp.float32) * 2.0
              ).astype(jnp.bfloat16)
    # Power-of-two per-token scales make both x/s and x*(1/s) exact, so the
    # check stays tight even on the fast path.
    scale2 = (2.0 ** -(3.0 + (jnp.arange(25) % 3))).astype(jnp.float32)[:, None]
    zero2 = jnp.full((25, 1), 128.0, dtype=jnp.float32)
    y2 = jax.block_until_ready(act_quantize_pallas(x_bf16, scale2, zero2, maxq))
    assert y2.dtype == jnp.bfloat16, "output dtype must follow input dtype"
    y2_ref = reference_forward(x_bf16.astype(jnp.float32), scale2, zero2,
                               maxq).astype(jnp.bfloat16)
    assert jnp.allclose(y2.astype(jnp.float32), y2_ref.astype(jnp.float32),
                        atol=1e-5, rtol=1e-5), "bf16/tail forward mismatch"

    # ---- Test 3: fused find_params + forward (incl. all-zero token row) -----
    x3 = x.at[0, 3, :].set(0.0)                      # exercises xmin==xmax==0
    y3 = jax.block_until_ready(act_quant_fused_pallas(x3, maxq))
    s3, z3 = find_params(x3, maxq)
    y3_ref = reference_forward(x3.reshape(-1, 128), s3, z3, maxq).reshape(x3.shape)
    d3 = jnp.abs(y3 - y3_ref)
    assert float(jnp.max(d3)) <= float(jnp.max(s3)) * 1.05 + 1e-5, \
        "fused kernel error exceeds one quantization step"
    assert float(jnp.mean((d3 > 1e-4).astype(jnp.float32))) < 0.01, \
        "fused kernel: too many mismatches"

    print("KERNEL_OK")
</pallas_src>

<mosaic_0001>
module attributes {stable_mosaic.version = 11 : i64} {
  func.func @_act_quant_fwd_kernel(%arg0: i32, %arg1: memref<8x128xf32, #tpu.memory_space<vmem>>, %arg2: memref<8x2xf32, #tpu.memory_space<vmem>>, %arg3: memref<8x128xf32, #tpu.memory_space<vmem>>) attributes {dimension_semantics = [#tpu.dimension_semantics<parallel>], iteration_bounds = array<i64: 1>, scalar_prefetch = 0 : i64, scratch_operands = 0 : i64, tpu.core_type = #tpu.core_type<tc>, window_params = [{transform_indices = @transform_0, window_bounds = array<i64: 8, 128>}, {transform_indices = @transform_1, window_bounds = array<i64: 8, 2>}, {transform_indices = @transform_2, window_bounds = array<i64: 8, 128>}]} {
    %c0 = arith.constant 0 : index
    %c0_0 = arith.constant 0 : index
    %0 = vector.load %arg1[%c0, %c0_0] : memref<8x128xf32, #tpu.memory_space<vmem>>, vector<8x128xf32>
    %c0_1 = arith.constant 0 : index
    %c0_2 = arith.constant 0 : index
    %1 = vector.load %arg2[%c0_1, %c0_2] : memref<8x2xf32, #tpu.memory_space<vmem>>, vector<8x2xf32>
    %2 = vector.extract_strided_slice %1 {offsets = [0, 0], sizes = [8, 1], strides = [1, 1]} : vector<8x2xf32> to vector<8x1xf32>
    %3 = vector.extract_strided_slice %1 {offsets = [0, 1], sizes = [8, 1], strides = [1, 1]} : vector<8x2xf32> to vector<8x1xf32>
    %cst = arith.constant 1.000000e+00 : f32
    %4 = vector.broadcast %cst : f32 to vector<8x1xf32>
    %5 = arith.divf %4, %2 : vector<8x1xf32>
    %6 = vector.broadcast %5 : vector<8x1xf32> to vector<8x128xf32>
    %7 = arith.mulf %0, %6 : vector<8x128xf32>
    %8 = math.roundeven %7 : vector<8x128xf32>
    %9 = vector.broadcast %3 : vector<8x1xf32> to vector<8x128xf32>
    %10 = arith.addf %8, %9 : vector<8x128xf32>
    %cst_3 = arith.constant 0.000000e+00 : f32
    %cst_4 = arith.constant 2.550000e+02 : f32
    %11 = vector.broadcast %cst_3 : f32 to vector<8x128xf32>
    %12 = arith.maximumf %11, %10 : vector<8x128xf32>
    %13 = vector.broadcast %cst_4 : f32 to vector<8x128xf32>
    %14 = arith.minimumf %13, %12 : vector<8x128xf32>
    %15 = vector.broadcast %3 : vector<8x1xf32> to vector<8x128xf32>
    %16 = arith.subf %14, %15 : vector<8x128xf32>
    %17 = vector.broadcast %2 : vector<8x1xf32> to vector<8x128xf32>
    %18 = arith.mulf %17, %16 : vector<8x128xf32>
    %c0_5 = arith.constant 0 : index
    %c0_6 = arith.constant 0 : index
    %19 = vector.load %arg3[%c0_5, %c0_6] : memref<8x128xf32, #tpu.memory_space<vmem>>, vector<8x128xf32>
    tpu.vector_store %arg3[%c0_5, %c0_6], %18 {strides = array<i32>} : memref<8x128xf32, #tpu.memory_space<vmem>>, vector<8x128xf32>,
    return
  }
  func.func @transform_0(%arg0: i32) -> (i32, i32) {
    %c0_i32 = arith.constant 0 : i32
    %c0_i32_0 = arith.constant 0 : i32
    return %arg0, %c0_i32 : i32, i32
  }
  func.func @transform_1(%arg0: i32) -> (i32, i32) {
    %c0_i32 = arith.constant 0 : i32
    %c0_i32_0 = arith.constant 0 : i32
    return %arg0, %c0_i32 : i32, i32
  }
  func.func @transform_2(%arg0: i32) -> (i32, i32) {
    %c0_i32 = arith.constant 0 : i32
    %c0_i32_0 = arith.constant 0 : i32
    return %arg0, %c0_i32 : i32, i32
  }
}

</mosaic_0001>

<llo_original>
// kernel: tpu_custom_call.1
$region0: #{tpu_custom_call.1}
  #allocation0 [shape = 'u32[]', space=smem, size = 0x4, offset = 0x4, fixed_abs, tag = 'smem constant byte address 0x4 - core index']
  #allocation1 [shape = 'u32[144,128]{1,0:T(1,128)}', space=vmem, size = 0x12000, scoped, tag = 'internal scratch']
  %s0 = inlined_call_operand.vmem [shape: f32[8,128], index: 0, kind: input, shape index: {}]
  %s1 = inlined_call_operand.vmem [shape: f32[8,2], index: 1, kind: input, shape index: {}]
  %s2 = inlined_call_operand.hbm [shape: f32[8,128], index: 2, kind: output, shape index: {}]
  %s3 = sld [smem:[#allocation0]]
  $region18: #{tpu_custom_call.1} parent=0
    _
  %s5 = ssub.s32 1, %s3
  %s6 = scalar_select 0, %s5, %s3
  $region1: #{tpu_custom_call.1} parent=0
    #allocation2 [shape = 'u8[4096]{0}', space=vmem, size = 0x1000, scoped, tag = 'output window, operand 0, single buffered']
    #allocation3 [shape = 's32[1]{0}', space=sflag, size = 0x4, scoped, tag = 'scoped memory for tpu_custom_call.1']
    %7 = vsyncpa [#allocation3], 0
    // Predicated region
    $region2: #{tpu_custom_call.1} parent=1 // pred_check
      _
    $region3: #{tpu_custom_call.1} parent=1 // pred_check_branch
      %9 = sbr.rel (0) target = $region5
    $region4: #{tpu_custom_call.1} parent=1 // pred_region
      _
    $region5: #{tpu_custom_call.1} parent=1 // pred_fallthru
      _
    // Predicated region
    $region6: #{tpu_custom_call.1} parent=1 // pred_check
      _
    $region7: #{tpu_custom_call.1} parent=1 // pred_check_branch
      %11 = sbr.rel (0) target = $region9
    $region8: #{tpu_custom_call.1} parent=1 // pred_region
      _
    $region9: #{tpu_custom_call.1} parent=1 // pred_fallthru
      _
    %v12 = vld [vmem:[%s0] sm:$0xff]
    %v13 = vld [vmem:[%s1] sm:$0xff]
    %v14 = vrcp.pop %v13
    %v15 = vmul.f32 1.0, %v14
    %17 = vset.pattern.permute.xlu0 0
    %18 = vperm.xlu0 %17, %v15
    %v19 = vpop.permute.xlu0 %18
    %v21 = vmul.f32 %v12, %v19
    %v22 = vround.ne.pseudo %v21
    %24 = vset.pattern.permute.xlu0 1
    %25 = vperm.xlu0 %24, %v13
    %v26 = vpop.permute.xlu0 %25
    %v28 = vadd.f32 %v22, %v26
    %v29 = vmax.f32 %v28, 0.0
    %v30 = vmin.f32 %v29, 255.0
    %v31 = vsub.f32 %v30, %v26
    %32 = vset.pattern.permute.xlu0 0
    %33 = vperm.xlu0 %32, %v13
    %v34 = vpop.permute.xlu0 %33
    %v36 = vmul.f32 %v34, %v31
    %37 = vst [vmem:[#allocation2] sm:$0xff] %v36
    // Predicated region
    $region10: #{tpu_custom_call.1} parent=1 // pred_check
      _
    $region11: #{tpu_custom_call.1} parent=1 // pred_check_branch
      %39 = sbr.rel (0) target = $region13
    $region12: #{tpu_custom_call.1} parent=1 // pred_region
      %s41 = ssub.s32 128, 128
      %42 = vsyncadd [#allocation3], %s41
      %s44 = sshll.u32 [#allocation2], 4
      %s45 = int_to_ptr.vmem [resolvable:$true] %s44
      %47 = dma.vmem_to_hbm [thread:$0]  %s45, 128, %s2, [#allocation3]
    $region13: #{tpu_custom_call.1} parent=1 // pred_fallthru
      _
    // Predicated region
    $region14: #{tpu_custom_call.1} parent=1 // pred_check
      _
    $region15: #{tpu_custom_call.1} parent=1 // pred_check_branch
      %49 = sbr.rel (0) target = $region17
    $region16: #{tpu_custom_call.1} parent=1 // pred_region
      %50 = dma.done [#allocation3], 128
    $region17: #{tpu_custom_call.1} parent=1 // pred_fallthru
      _
    %51 = vsyncpa [#allocation3], 1

</llo_original>
